<compile_context>
chip_gen: v5e
topology: v5e:2x2
jax: 0.10.0
libtpu: 0.0.40
codegen_flags: <defaults>
</compile_context>

<pallas_src>
import jax
import jax.numpy as jnp
from jax.experimental import pallas as pl
from jax.experimental.pallas import tpu as pltpu

LEAKY_SLOPE = 0.01   # nn.LeakyReLU() default negative_slope
BN_EPS = 1e-5        # nn.BatchNorm2d default eps


# ----------------------------- Pallas kernel --------------------------------
def _convmm_bn_lrelu_kernel(w_ref, a_ref, shift_ref, o_ref):
    # w_ref:     (Cout, K)  bf16, BN scale pre-folded
    # a_ref:     (K, TM)    bf16, transposed im2col patches (M on lanes)
    # shift_ref: (Cout, 1)  f32,  fused BN shift
    # o_ref:     (Cout, TM) f32,  lane-dense output tile
    acc = jnp.dot(w_ref[...], a_ref[...], preferred_element_type=jnp.float32)
    y = acc + shift_ref[...]                              # BatchNorm (eval) shift
    o_ref[...] = jnp.where(y >= 0.0, y, LEAKY_SLOPE * y)  # LeakyReLU


# ------------------------------ JAX glue -------------------------------------
def _pick_tm(m):
    """Largest lane tile that still leaves >=2 grid steps (v7x has 2 TCs)."""
    for tm in (2048, 1024, 512, 256, 128):
        if m >= 2 * tm:
            return tm
    return 128


def _patches_kt_m(x_cnhw, kh, kw, stride, pad):
    """x: (C, N, H, W) -> transposed im2col (K, M); K=(tap, c), M=(n, ho, wo)."""
    c, n, h, w = x_cnhw.shape
    xp = jnp.pad(x_cnhw, ((0, 0), (0, 0), (pad, pad), (pad, pad)))
    hp, wp = h + 2 * pad, w + 2 * pad
    ho = (hp - kh) // stride + 1
    wo = (wp - kw) // stride + 1
    taps = [xp[:, :, di:di + stride * ho:stride, dj:dj + stride * wo:stride]
            for di in range(kh) for dj in range(kw)]
    a = jnp.stack(taps, axis=0)                 # (kh*kw, C, N, Ho, Wo)
    return a.reshape(kh * kw * c, n * ho * wo), ho, wo


def conv_bn_lrelu_cnhw(x, w_oihw, gamma, beta, mean, var, *, stride, pad):
    """Conv2d(bias=False) + BatchNorm2d(eval) + LeakyReLU.  x: (Cin,N,H,W) -> (Cout,N,Ho,Wo)."""
    cin, n, h, wdim = x.shape
    cout, _, kh, kw = w_oihw.shape
    k = kh * kw * cin

    a, ho, wo = _patches_kt_m(x, kh, kw, stride, pad)
    m = n * ho * wo

    # Fold BN scale into the weight matrix (one-time transform, constant-folded under
    # jit); the kernel only applies the additive shift.
    scale = gamma / jnp.sqrt(var + BN_EPS)                           # (Cout,)
    shift = (beta - mean * scale).reshape(cout, 1).astype(jnp.float32)
    # PyTorch weight (Cout, Cin, KH, KW) -> (Cout, KH, KW, Cin) -> (Cout, K), K=(tap,cin)
    wmat = jnp.transpose(w_oihw, (0, 2, 3, 1)).reshape(cout, k)
    wmat = (wmat * scale[:, None]).astype(jnp.bfloat16)

    a = a.astype(jnp.bfloat16)                  # bf16 operands, f32 accumulation
    tm = _pick_tm(m)
    mp = pl.cdiv(m, tm) * tm
    if mp != m:
        a = jnp.pad(a, ((0, 0), (0, mp - m)))

    flops = 2 * m * k * cout + 2 * m * cout
    bytes_accessed = a.size * 2 + wmat.size * 2 + shift.size * 4 + cout * mp * 4

    out = pl.pallas_call(
        _convmm_bn_lrelu_kernel,
        out_shape=jax.ShapeDtypeStruct((cout, mp), jnp.float32),
        grid=(mp // tm,),
        in_specs=[
            pl.BlockSpec((cout, k), lambda i: (0, 0)),    # folded weight (resident)
            pl.BlockSpec((k, tm), lambda i: (0, i)),      # patch^T tile, M on lanes
            pl.BlockSpec((cout, 1), lambda i: (0, 0)),    # BN shift
        ],
        out_specs=pl.BlockSpec((cout, tm), lambda i: (0, i)),   # lane-dense stores
        compiler_params=pltpu.CompilerParams(
            dimension_semantics=("parallel",),
            vmem_limit_bytes=32 * 1024 * 1024,
        ),
        cost_estimate=pl.CostEstimate(
            flops=flops, transcendentals=0, bytes_accessed=bytes_accessed),
    )(wmat, a, shift)

    return out[:, :m].reshape(cout, n, ho, wo)


def _nearest_resize_cnhw(x, ho, wo):
    """F.interpolate(mode='nearest') semantics: src = floor(dst * in / out)."""
    c, n, h, w = x.shape
    ri = (jnp.arange(ho) * h) // ho
    ci = (jnp.arange(wo) * w) // wo
    return x[:, :, ri][:, :, :, ci]


def conv2x_forward(x_nchw, rem_nchw, params):
    """Conv2x.forward(x, rem) with NCHW I/O (PyTorch convention)."""
    # One-time layout change to channel-major CNHW (no per-conv activation transposes).
    x = jnp.transpose(x_nchw, (1, 0, 2, 3))
    rem = jnp.transpose(rem_nchw, (1, 0, 2, 3))

    # conv1: 3x3, stride 2, pad 1 + BN + LeakyReLU
    x = conv_bn_lrelu_cnhw(x, params["w1"], params["g1"], params["b1"],
                           params["m1"], params["v1"], stride=2, pad=1)

    # F.interpolate(..., size=(rem.H, rem.W), mode='nearest') if shapes mismatch
    if x.shape[2:4] != rem.shape[2:4]:
        x = _nearest_resize_cnhw(x, rem.shape[2], rem.shape[3])

    # concat=True: channel-dim concatenation (channel is axis 0 in CNHW)
    x = jnp.concatenate([x, rem], axis=0)

    # conv2: 3x3, stride 1, pad 1 + BN + LeakyReLU (out = 2*out_channels, keep_concat)
    x = conv_bn_lrelu_cnhw(x, params["w2"], params["g2"], params["b2"],
                           params["m2"], params["v2"], stride=1, pad=1)

    return jnp.transpose(x, (1, 0, 2, 3))       # back to NCHW


# --------------------------- deterministic params ----------------------------
def init_conv2x_params(key, in_channels, out_channels):
    ks = jax.random.split(key, 10)
    c2_in = out_channels * 2          # concat=True
    c2_out = out_channels * 2         # keep_concat=True
    f32 = jnp.float32
    return {
        # conv1: Conv2d(in_channels, out_channels, 3, stride=2, padding=1, bias=False)
        "w1": 0.1 * jax.random.normal(ks[0], (out_channels, in_channels, 3, 3), f32),
        "g1": 1.0 + 0.1 * jax.random.normal(ks[1], (out_channels,), f32),
        "b1": 0.1 * jax.random.normal(ks[2], (out_channels,), f32),
        "m1": 0.1 * jax.random.normal(ks[3], (out_channels,), f32),
        "v1": 0.5 + 0.1 * jnp.abs(jax.random.normal(ks[4], (out_channels,), f32)),
        # conv2: Conv2d(2*out, 2*out, 3, stride=1, padding=1, bias=False)
        "w2": 0.1 * jax.random.normal(ks[5], (c2_out, c2_in, 3, 3), f32),
        "g2": 1.0 + 0.1 * jax.random.normal(ks[6], (c2_out,), f32),
        "b2": 0.1 * jax.random.normal(ks[7], (c2_out,), f32),
        "m2": 0.1 * jax.random.normal(ks[8], (c2_out,), f32),
        "v2": 0.5 + 0.1 * jnp.abs(jax.random.normal(ks[9], (c2_out,), f32)),
    }


if __name__ == "__main__":
    key = jax.random.PRNGKey(0)
    k_x, k_rem, k_p = jax.random.split(key, 3)

    in_channels, out_channels = 4, 8
    N, H, W = 2, 32, 32   # spatial 32 so each conv has M=512 -> >=2 parallel grid steps

    x = jax.random.normal(k_x, (N, in_channels, H, W), jnp.float32)
    # conv1 halves spatial dims -> rem lives at (H//2, W//2) with out_channels channels
    rem = jax.random.normal(k_rem, (N, out_channels, H // 2, W // 2), jnp.float32)

    params = init_conv2x_params(k_p, in_channels, out_channels)

    out = jax.jit(conv2x_forward)(x, rem, params)
    out = jax.block_until_ready(out)

    expected_shape = (N, out_channels * 2, H // 2, W // 2)
    assert out.shape == expected_shape, (out.shape, expected_shape)
    assert jnp.all(jnp.isfinite(out))
    print("KERNEL_OK")
</pallas_src>

<mosaic_0001>
module attributes {stable_mosaic.version = 11 : i64} {
  func.func @_convmm_bn_lrelu_kernel(%arg0: i32, %arg1: memref<8x36xbf16, #tpu.memory_space<vmem>>, %arg2: memref<36x256xbf16, #tpu.memory_space<vmem>>, %arg3: memref<8x1xf32, #tpu.memory_space<vmem>>, %arg4: memref<8x256xf32, #tpu.memory_space<vmem>>) attributes {dimension_semantics = [#tpu.dimension_semantics<parallel>], iteration_bounds = array<i64: 2>, scalar_prefetch = 0 : i64, scratch_operands = 0 : i64, tpu.core_type = #tpu.core_type<tc>, window_params = [{pipeline_mode = #tpu.pipeline_mode<synchronous>, transform_indices = @transform_0, window_bounds = array<i64: 8, 36>}, {transform_indices = @transform_1, window_bounds = array<i64: 36, 256>}, {pipeline_mode = #tpu.pipeline_mode<synchronous>, transform_indices = @transform_2, window_bounds = array<i64: 8, 1>}, {transform_indices = @transform_3, window_bounds = array<i64: 8, 256>}]} {
    %c0 = arith.constant 0 : index
    %c0_0 = arith.constant 0 : index
    %0 = vector.load %arg1[%c0, %c0_0] : memref<8x36xbf16, #tpu.memory_space<vmem>>, vector<8x36xbf16>
    %c0_1 = arith.constant 0 : index
    %c0_2 = arith.constant 0 : index
    %1 = vector.load %arg2[%c0_1, %c0_2] : memref<36x256xbf16, #tpu.memory_space<vmem>>, vector<36x256xbf16>
    %cst = arith.constant dense<0.000000e+00> : vector<8x256xf32>
    %2 = tpu.matmul %0, %1, %cst {dimension_numbers = #tpu.dot_dimension_numbers<[1], [0], [0], [1], [0, 0, 1, 1], [], []>} : vector<8x36xbf16>, vector<36x256xbf16>, vector<8x256xf32> -> vector<8x256xf32>
    %c0_3 = arith.constant 0 : index
    %c0_4 = arith.constant 0 : index
    %3 = vector.load %arg3[%c0_3, %c0_4] : memref<8x1xf32, #tpu.memory_space<vmem>>, vector<8x1xf32>
    %4 = vector.broadcast %3 : vector<8x1xf32> to vector<8x256xf32>
    %5 = arith.addf %2, %4 : vector<8x256xf32>
    %cst_5 = arith.constant 0.000000e+00 : f32
    %6 = vector.broadcast %cst_5 : f32 to vector<8x256xf32>
    %7 = arith.cmpf oge, %5, %6 : vector<8x256xf32>
    %cst_6 = arith.constant 0.00999999977 : f32
    %8 = vector.broadcast %cst_6 : f32 to vector<8x256xf32>
    %9 = arith.mulf %8, %5 : vector<8x256xf32>
    %10 = arith.select %7, %5, %9 : vector<8x256xi1>, vector<8x256xf32>
    %c0_7 = arith.constant 0 : index
    %c0_8 = arith.constant 0 : index
    %11 = vector.load %arg4[%c0_7, %c0_8] : memref<8x256xf32, #tpu.memory_space<vmem>>, vector<8x256xf32>
    tpu.vector_store %arg4[%c0_7, %c0_8], %10 {strides = array<i32>} : memref<8x256xf32, #tpu.memory_space<vmem>>, vector<8x256xf32>,
    return
  }
  func.func @transform_0(%arg0: i32) -> (i32, i32) {
    %c0_i32 = arith.constant 0 : i32
    %c0_i32_0 = arith.constant 0 : i32
    %c0_i32_1 = arith.constant 0 : i32
    return %c0_i32, %c0_i32_0 : i32, i32
  }
  func.func @transform_1(%arg0: i32) -> (i32, i32) {
    %c0_i32 = arith.constant 0 : i32
    %c0_i32_0 = arith.constant 0 : i32
    return %c0_i32, %arg0 : i32, i32
  }
  func.func @transform_2(%arg0: i32) -> (i32, i32) {
    %c0_i32 = arith.constant 0 : i32
    %c0_i32_0 = arith.constant 0 : i32
    %c0_i32_1 = arith.constant 0 : i32
    return %c0_i32, %c0_i32_0 : i32, i32
  }
  func.func @transform_3(%arg0: i32) -> (i32, i32) {
    %c0_i32 = arith.constant 0 : i32
    %c0_i32_0 = arith.constant 0 : i32
    return %c0_i32, %arg0 : i32, i32
  }
}

module attributes {stable_mosaic.version = 11 : i64} {
  func.func @_convmm_bn_lrelu_kernel(%arg0: i32, %arg1: memref<16x144xbf16, #tpu.memory_space<vmem>>, %arg2: memref<144x256xbf16, #tpu.memory_space<vmem>>, %arg3: memref<16x1xf32, #tpu.memory_space<vmem>>, %arg4: memref<16x256xf32, #tpu.memory_space<vmem>>) attributes {dimension_semantics = [#tpu.dimension_semantics<parallel>], iteration_bounds = array<i64: 2>, scalar_prefetch = 0 : i64, scratch_operands = 0 : i64, tpu.core_type = #tpu.core_type<tc>, window_params = [{pipeline_mode = #tpu.pipeline_mode<synchronous>, transform_indices = @transform_0, window_bounds = array<i64: 16, 144>}, {transform_indices = @transform_1, window_bounds = array<i64: 144, 256>}, {pipeline_mode = #tpu.pipeline_mode<synchronous>, transform_indices = @transform_2, window_bounds = array<i64: 16, 1>}, {transform_indices = @transform_3, window_bounds = array<i64: 16, 256>}]} {
    %c0 = arith.constant 0 : index
    %c0_0 = arith.constant 0 : index
    %0 = vector.load %arg1[%c0, %c0_0] : memref<16x144xbf16, #tpu.memory_space<vmem>>, vector<16x144xbf16>
    %c0_1 = arith.constant 0 : index
    %c0_2 = arith.constant 0 : index
    %1 = vector.load %arg2[%c0_1, %c0_2] : memref<144x256xbf16, #tpu.memory_space<vmem>>, vector<144x256xbf16>
    %cst = arith.constant dense<0.000000e+00> : vector<16x256xf32>
    %2 = tpu.matmul %0, %1, %cst {dimension_numbers = #tpu.dot_dimension_numbers<[1], [0], [0], [1], [0, 0, 1, 1], [], []>} : vector<16x144xbf16>, vector<144x256xbf16>, vector<16x256xf32> -> vector<16x256xf32>
    %c0_3 = arith.constant 0 : index
    %c0_4 = arith.constant 0 : index
    %3 = vector.load %arg3[%c0_3, %c0_4] : memref<16x1xf32, #tpu.memory_space<vmem>>, vector<16x1xf32>
    %4 = vector.broadcast %3 : vector<16x1xf32> to vector<16x256xf32>
    %5 = arith.addf %2, %4 : vector<16x256xf32>
    %cst_5 = arith.constant 0.000000e+00 : f32
    %6 = vector.broadcast %cst_5 : f32 to vector<16x256xf32>
    %7 = arith.cmpf oge, %5, %6 : vector<16x256xf32>
    %cst_6 = arith.constant 0.00999999977 : f32
    %8 = vector.broadcast %cst_6 : f32 to vector<16x256xf32>
    %9 = arith.mulf %8, %5 : vector<16x256xf32>
    %10 = arith.select %7, %5, %9 : vector<16x256xi1>, vector<16x256xf32>
    %c0_7 = arith.constant 0 : index
    %c0_8 = arith.constant 0 : index
    %11 = vector.load %arg4[%c0_7, %c0_8] : memref<16x256xf32, #tpu.memory_space<vmem>>, vector<16x256xf32>
    tpu.vector_store %arg4[%c0_7, %c0_8], %10 {strides = array<i32>} : memref<16x256xf32, #tpu.memory_space<vmem>>, vector<16x256xf32>,
    return
  }
  func.func @transform_0(%arg0: i32) -> (i32, i32) {
    %c0_i32 = arith.constant 0 : i32
    %c0_i32_0 = arith.constant 0 : i32
    %c0_i32_1 = arith.constant 0 : i32
    return %c0_i32, %c0_i32_0 : i32, i32
  }
  func.func @transform_1(%arg0: i32) -> (i32, i32) {
    %c0_i32 = arith.constant 0 : i32
    %c0_i32_0 = arith.constant 0 : i32
    return %c0_i32, %arg0 : i32, i32
  }
  func.func @transform_2(%arg0: i32) -> (i32, i32) {
    %c0_i32 = arith.constant 0 : i32
    %c0_i32_0 = arith.constant 0 : i32
    %c0_i32_1 = arith.constant 0 : i32
    return %c0_i32, %c0_i32_0 : i32, i32
  }
  func.func @transform_3(%arg0: i32) -> (i32, i32) {
    %c0_i32 = arith.constant 0 : i32
    %c0_i32_0 = arith.constant 0 : i32
    return %c0_i32, %arg0 : i32, i32
  }
}

</mosaic_0001>

<llo_original>
// kernel: conv2x_forward.2
$region0: #{conv2x_forward.2}
  #allocation0 [shape = 'u32[]', space=smem, size = 0x4, offset = 0x4, fixed_abs, tag = 'smem constant byte address 0x4 - core index']
  #allocation1 [shape = 'u32[72,128]{1,0:T(1,128)}', space=vmem, size = 0x9000, scoped, tag = 'internal scratch']
  %s0 = inlined_call_operand.vmem [shape: bf16[8,36], index: 0, kind: input, shape index: {}]
  %s1 = inlined_call_operand.vmem [shape: bf16[36,512], index: 1, kind: input, shape index: {}]
  %s2 = inlined_call_operand.vmem [shape: f32[8,1], index: 2, kind: input, shape index: {}]
  %s3 = inlined_call_operand.vmem [shape: f32[8,512], index: 3, kind: output, shape index: {}]
  %s4 = sld [smem:[#allocation0]]
  $region83: #{conv2x_forward.2} parent=0
    _
  %s6 = ssub.s32 1, %s4
  %s7 = scalar_select 0, %s6, %s4
  $region1: #{conv2x_forward.2} parent=0
    #allocation2 [shape = 'u8[40960]{0}', space=vmem, size = 0xa000, scoped, tag = 'input window, operand 1']
    loop: start=0, step=1, limit=4
    $region2: #{conv2x_forward.2} parent=1 // loop_pre_header
      _
    $region3: #{conv2x_forward.2} parent=1 // loop_header
      %s9 = sphi 0, %s13
      %p10 = scmp.ge.s32.totalorder %s9, 4
      %s17 = sphi 0, %s17
      %s19 = sphi 0, %s17
      %s20 = sphi 0, %s19
      %s34 = sphi 0, %s20
      %s40 = sphi 0, %s42
      %s43 = sphi 0, %s40
      %s44 = sphi 0, %s43
      %s60 = sphi 0, %s44
      %s64 = sphi 0, %s64
      %s66 = sphi 0, %s64
      %s67 = sphi 0, %s66
      %s81 = sphi 0, %s67
      %s87 = sphi 0, %s89
      %s90 = sphi 0, %s87
      %s91 = sphi 0, %s90
      %s107 = sphi 0, %s91
    $region4: #{conv2x_forward.2} parent=1 // loop_header_branch
      %12 = sbr.rel (%p10) target = $region8
    $region5: #{conv2x_forward.2} parent=1 // loop_body
      %s14 = ssub.s32 %s9, 1
      %s15 = ssub.s32 %s9, 2
      %s16 = sadd.s32 %s9, 1
      %s18 = sadd.s32 %s17, 1
      %p21 = scmp.eq.s32.totalorder %s9, 1
      %p22 = scmp.ne.s32.totalorder %s17, %s19
      %p23 = scmp.eq.s32.totalorder %s9, 0
      %p24 = por %p22, %p23
      %p25 = scmp.ne.s32.totalorder %s17, %s19
      %p26 = scmp.eq.s32.totalorder %s14, 1
      %p27 = por %p25, %p26
      %p28 = scmp.ne.s32.totalorder %s19, %s20
      %p29 = scmp.eq.s32.totalorder %s14, 0
      %p30 = por %p28, %p29
      %p31 = scmp.ne.s32.totalorder %s19, %s20
      %p32 = scmp.eq.s32.totalorder %s15, 1
      %p33 = por %p31, %p32
      %p35 = scmp.ne.s32.totalorder %s20, %s34
      %p36 = scmp.eq.s32.totalorder %s15, 0
      %p37 = por %p35, %p36
      %s38 = ssub.s32 %s9, %s16
      %p39 = scmp.eq.s32.totalorder %s38, 0
      %s41 = sadd.s32 %s40, 1
      %s42 = scalar_select %p39, %s40, %s41
      %p45 = pneg %p39
      %p46 = scmp.eq.s32.totalorder %s9, 1
      %p47 = por %p45, %p46
      %p48 = scmp.ne.s32.totalorder %s40, %s43
      %p49 = scmp.eq.s32.totalorder %s9, 0
      %p50 = por %p48, %p49
      %p51 = scmp.ne.s32.totalorder %s40, %s43
      %p52 = scmp.eq.s32.totalorder %s14, 1
      %p53 = por %p51, %p52
      %p54 = scmp.ne.s32.totalorder %s43, %s44
      %p55 = scmp.eq.s32.totalorder %s14, 0
      %p56 = por %p54, %p55
      %p57 = scmp.ne.s32.totalorder %s43, %s44
      %p58 = scmp.eq.s32.totalorder %s15, 1
      %p59 = por %p57, %p58
      %p61 = scmp.ne.s32.totalorder %s44, %s60
      %p62 = scmp.eq.s32.totalorder %s15, 0
      %p63 = por %p61, %p62
      %s65 = sadd.s32 %s64, 1
      %p68 = scmp.eq.s32.totalorder %s9, 1
      %p69 = scmp.ne.s32.totalorder %s64, %s66
      %p70 = scmp.eq.s32.totalorder %s9, 0
      %p71 = por %p69, %p70
      %p72 = scmp.ne.s32.totalorder %s64, %s66
      %p73 = scmp.eq.s32.totalorder %s14, 1
      %p74 = por %p72, %p73
      %p75 = scmp.ne.s32.totalorder %s66, %s67
      %p76 = scmp.eq.s32.totalorder %s14, 0
      %p77 = por %p75, %p76
      %p78 = scmp.ne.s32.totalorder %s66, %s67
      %p79 = scmp.eq.s32.totalorder %s15, 1
      %p80 = por %p78, %p79
      %p82 = scmp.ne.s32.totalorder %s67, %s81
      %p83 = scmp.eq.s32.totalorder %s15, 0
      %p84 = por %p82, %p83
      %s85 = ssub.s32 %s9, %s16
      %p86 = scmp.eq.s32.totalorder %s85, 0
      %s88 = sadd.s32 %s87, 1
      %s89 = scalar_select %p86, %s87, %s88
      %p92 = pneg %p86
      %p93 = scmp.eq.s32.totalorder %s9, 1
      %p94 = por %p92, %p93
      %p95 = scmp.ne.s32.totalorder %s87, %s90
      %p96 = scmp.eq.s32.totalorder %s9, 0
      %p97 = por %p95, %p96
      %p98 = scmp.ne.s32.totalorder %s87, %s90
      %p99 = scmp.eq.s32.totalorder %s14, 1
      %p100 = por %p98, %p99
      %p101 = scmp.ne.s32.totalorder %s90, %s91
      %p102 = scmp.eq.s32.totalorder %s14, 0
      %p103 = por %p101, %p102
      %p104 = scmp.ne.s32.totalorder %s90, %s91
      %p105 = scmp.eq.s32.totalorder %s15, 1
      %p106 = por %p104, %p105
      %p108 = scmp.ne.s32.totalorder %s91, %s107
      %p109 = scmp.eq.s32.totalorder %s15, 0
      %p110 = por %p108, %p109
      %p111 = scmp.le.s32.totalorder 1, %s9
      %p112 = scmp.lt.s32.totalorder %s9, 3
      %p113 = pnand %p111, %p112
      %p114 = pneg %p113
      // Predicated region
      $region9: #{conv2x_forward.2} parent=5 // pred_check
        _
      $region10: #{conv2x_forward.2} parent=5 // pred_check_branch
        %116 = sbr.rel (%p113) target = $region12
      $region11: #{conv2x_forward.2} parent=5 // pred_region
        %s117 = ssub.s32 %s9, 1
        // Predicated region
        $region13: #{conv2x_forward.2} parent=11 // pred_check
          %p118 = pneg %p30
        $region14: #{conv2x_forward.2} parent=11 // pred_check_branch
          %120 = sbr.rel (%p118) target = $region16
        $region15: #{conv2x_forward.2} parent=11 // pred_region
          _
        $region16: #{conv2x_forward.2} parent=11 // pred_fallthru
          _
        // Predicated region
        $region17: #{conv2x_forward.2} parent=11 // pred_check
          %p121 = pneg %p77
        $region18: #{conv2x_forward.2} parent=11 // pred_check_branch
          %123 = sbr.rel (%p121) target = $region20
        $region19: #{conv2x_forward.2} parent=11 // pred_region
          _
        $region20: #{conv2x_forward.2} parent=11 // pred_fallthru
          _
      $region12: #{conv2x_forward.2} parent=5 // pred_fallthru
        _
      %p124 = scmp.lt.s32.totalorder %s9, 2
      // Predicated region
      $region21: #{conv2x_forward.2} parent=5 // pred_check
        %p125 = pneg %p124
      $region22: #{conv2x_forward.2} parent=5 // pred_check_branch
        %127 = sbr.rel (%p125) target = $region24
      $region23: #{conv2x_forward.2} parent=5 // pred_region
        // Predicated region
        $region25: #{conv2x_forward.2} parent=23 // pred_check
          %p128 = pneg %p50
        $region26: #{conv2x_forward.2} parent=23 // pred_check_branch
          %130 = sbr.rel (%p128) target = $region28
        $region27: #{conv2x_forward.2} parent=23 // pred_region
          %s131 = sand.u32 %s40, 1
          %s132 = sand.u32 %s40, 1
          %s133 = smul.addr %s132, 40
          %s134 = scalar_lea.vmem [#allocation2], %s133
          %s135 = smul.u32 2, %s9
          %s136 = smul.addr %s135, 4
          %s137 = scalar_lea.vmem %s1, %s136
          // Predicated region
          $region29: #{conv2x_forward.2} parent=27 // pred_check
            _
          $region30: #{conv2x_forward.2} parent=27 // pred_check_branch
            %139 = sbr.rel (0) target = $region32
          $region31: #{conv2x_forward.2} parent=27 // pred_region
            // Predicated region
            $region33: #{conv2x_forward.2} parent=31 // pred_check
              _
            $region34: #{conv2x_forward.2} parent=31 // pred_check_branch
              %141 = sbr.rel (0) target = $region36
            $region35: #{conv2x_forward.2} parent=31 // pred_region
              // Predicated region
              $region48: #{conv2x_forward.2} parent=35 // pred_check
                _
              $region49: #{conv2x_forward.2} parent=35 // pred_check_branch
                %165 = sbr.rel (0) target = $region51
              $region50: #{conv2x_forward.2} parent=35 // pred_region
                loop: start=0, step=1, limit=1
                $region52: #{conv2x_forward.2} parent=50 // loop_pre_header
                  _
                $region53: #{conv2x_forward.2} parent=50 // loop_header
                  %s167 = sphi 0, %s171
                  %p168 = scmp.ge.s32.totalorder %s167, 1
                  %s172 = sphi %s137, %s137
                  %s173 = sphi %s134, %s134
                $region54: #{conv2x_forward.2} parent=50 // loop_header_branch
                  %170 = sbr.rel (%p168) target = $region58
                $region55: #{conv2x_forward.2} parent=50 // loop_body
                  %v174 = vld [vmem:[%s172] sm:$0xff]
                  %175 = vst [vmem:[%s173] sm:$0xff] %v174
                  %v176 = vld [vmem:[%s172 + $0x10] sm:$0xff]
                  %177 = vst [vmem:[%s173 + $0x8] sm:$0xff] %v176
                  %v178 = vld [vmem:[%s172 + $0x20] sm:$0xff]
                  %179 = vst [vmem:[%s173 + $0x10] sm:$0xff] %v178
                  %v180 = vld [vmem:[%s172 + $0x30] sm:$0xff]
                  %181 = vst [vmem:[%s173 + $0x18] sm:$0xff] %v180
                  %v182 = vld [vmem:[%s172 + $0x40] sm:$0xff]
                  %183 = vst [vmem:[%s173 + $0x20] sm:$0xff] %v182
                $region56: #{conv2x_forward.2} parent=50 // loop_footer
                  %s171 = sadd.s32 1, %s167
                $region57: #{conv2x_forward.2} parent=50 // loop_footer_branch
                  %166 = sbr.rel target = $region53
                $region58: #{conv2x_forward.2} parent=50 // loop_exit
                  _
              $region51: #{conv2x_forward.2} parent=35 // pred_fallthru
                _
              // Predicated region
              $region59: #{conv2x_forward.2} parent=35 // pred_check
                _
              $region60: #{conv2x_forward.2} parent=35 // pred_check_branch
                %185 = sbr.rel target = $region62
              $region61: #{conv2x_forward.2} parent=35 // pred_region
                _
              $region62: #{conv2x_forward.2} parent=35 // pred_fallthru
                _
            $region36: #{conv2x_forward.2} parent=31 // pred_fallthru
              _
            // Predicated region
            $region37: #{conv2x_forward.2} parent=31 // pred_check
              _
            $region38: #{conv2x_forward.2} parent=31 // pred_check_branch
              %143 = sbr.rel target = $region40
            $region39: #{conv2x_forward.2} parent=31 // pred_region
              %s145 = ssub.s32 256, 1
              loop: start=0, step=1, limit=1
              $region41: #{conv2x_forward.2} parent=39 // loop_pre_header
                _
              $region42: #{conv2x_forward.2} parent=39 // loop_header
                %s147 = sphi 0, %s151
                %p148 = scmp.ge.s32.totalorder %s147, 1
                %s152 = sphi %s137, %s137
                %s153 = sphi %s134, %s134
              $region43: #{conv2x_forward.2} parent=39 // loop_header_branch
                %150 = sbr.rel (%p148) target = $region47
              $region44: #{conv2x_forward.2} parent=39 // loop_body
                %v154 = vld [vmem:[%s152] sm:%s145]
                %155 = vst [vmem:[%s153] sm:%s145] %v154
                %v156 = vld [vmem:[%s152 + $0x10] sm:%s145]
                %157 = vst [vmem:[%s153 + $0x8] sm:%s145] %v156
                %v158 = vld [vmem:[%s152 + $0x20] sm:%s145]
                %159 = vst [vmem:[%s153 + $0x10] sm:%s145] %v158
                %v160 = vld [vmem:[%s152 + $0x30] sm:%s145]
                %161 = vst [vmem:[%s153 + $0x18] sm:%s145] %v160
                %v162 = vld [vmem:[%s152 + $0x40] sm:%s145]
                %163 = vst [vmem:[%s153 + $0x20] sm:%s145] %v162
              $region45: #{conv2x_forward.2} parent=39 // loop_footer
                %s151 = sadd.s32 1, %s147
              $region46: #{conv2x_forward.2} parent=39 // loop_footer_branch
                %146 = sbr.rel target = $region42
              $region47: #{conv2x_forward.2} parent=39 // loop_exit
                _
            $region40: #{conv2x_forward.2} parent=31 // pred_fallthru
              _
          $region32: #{conv2x_forward.2} parent=27 // pred_fallthru
            _
          %186 = vnop
        $region28: #{conv2x_forward.2} parent=23 // pred_fallthru
          _
      $region24: #{conv2x_forward.2} parent=5 // pred_fallthru
        _
      %p187 = scmp.le.s32.totalorder 1, %s9
      %p188 = scmp.lt.s32.totalorder %s9, 3
      %p189 = pnand %p187, %p188
      %p190 = pneg %p189
      // Predicated region
      $region63: #{conv2x_forward.2} parent=5 // pred_check
        _
      $region64: #{conv2x_forward.2} parent=5 // pred_check_branch
        %192 = sbr.rel (%p189) target = $region66
      $region65: #{conv2x_forward.2} parent=5 // pred_region
        %s193 = ssub.s32 %s9, 1
        %s194 = sand.u32 %s43, 1
        %s195 = sand.u32 %s43, 1
        %s196 = smul.addr %s195, 40
        %s197 = scalar_lea.vmem [#allocation2], %s196
        // Predicated region
        $region67: #{conv2x_forward.2} parent=65 // pred_check
          %p198 = pneg %p56
        $region68: #{conv2x_forward.2} parent=65 // pred_check_branch
          %200 = sbr.rel (%p198) target = $region70
        $region69: #{conv2x_forward.2} parent=65 // pred_region
          _
        $region70: #{conv2x_forward.2} parent=65 // pred_fallthru
          _
        %p201 = pneg %p30
        %p202 = pneg %p27
        %s203 = sand.u32 %s43, 1
        %s204 = sand.u32 %s43, 1
        %s205 = smul.addr %s204, 40
        %s206 = scalar_lea.vmem [#allocation2], %s205
        %p207 = pneg %p56
        %p208 = pneg %p53
        %p209 = pneg %p77
        %p210 = pneg %p74
        %p211 = pneg %p103
        %p212 = pneg %p100
        %s213 = smul.u32 2, %s14
        %p214 = scmp.lt.s32.totalorder %s213, 3
        %s215 = scalar_select %p214, %s213, 3
        %s216 = smul.addr %s215, 8
        %s217 = scalar_lea.vmem %s3, %s216
        %s218 = smul.u32 2, %s14
        %s219 = smul.u32 2, %s14
        %p220 = scmp.lt.s32.totalorder %s219, 3
        %s221 = scalar_select %p220, %s219, 3
        %s222 = smul.addr %s221, 8
        %s223 = scalar_lea.vmem %s3, %s222
        %s224 = smul.u32 2, %s14
        %v226 = vld [vmem:[%s0] sm:$0xf]
        %v227 = vld [vmem:[%s197] sm:$0xff]
        %v228 = vld [vmem:[%s197 + $0x8] sm:$0xff]
        %v229 = vld [vmem:[%s197 + $0x10] sm:$0xff]
        %v230 = vld [vmem:[%s197 + $0x18] sm:$0xff]
        %v231 = vld [vmem:[%s197 + $0x20] sm:$0x33]
        %v232 = vld [vmem:[%s2] sm:$0xff]
        %234 = vset.pattern.permute.xlu0 0
        %235 = vperm.xlu0 %234, %v232
        %v236 = vpop.permute.xlu0 %235
        %v243 = vunpack.c.l.b16 %v227
        %v244 = vunpack.c.h.b16 %v227
        %v245 = vunpack.c.l.b16 %v228
        %v246 = vunpack.c.h.b16 %v228
        %v247 = vunpack.c.l.b16 %v229
        %v248 = vunpack.c.h.b16 %v229
        %v249 = vunpack.c.l.b16 %v230
        %v250 = vunpack.c.h.b16 %v230
        %v251 = vunpack.c.l.b16 %v231
        %v252 = vunpack.c.h.b16 %v231
        %v253 = vpack.c.b16 %v245, %v243
        %v254 = vpack.c.b16 %v246, %v244
        %v255 = vpack.c.b16 %v249, %v247
        %v256 = vpack.c.b16 %v250, %v248
        %v257 = vpack.c.b16 %v251, %v251
        %v258 = vpack.c.b16 %v252, %v252
        %vm263 = vcmask 293888
        %v265 = vsel %vm263, %v226, 0
        %vm267 = vcmask 1041408
        %v269 = vsel %vm267, %v257, 0
        %v272 = vsel %vm267, %v258, 0
        %274 = vmatpush.bf16.msra.mxu0 0
        %275 = vmatpush.bf16.msra.mxu0 0
        %276 = vmatpush.bf16.msra.mxu0 0
        %277 = vmatpush.bf16.msra.mxu0 0
        %278 = vmatpush.bf16.msra.mxu0 0
        %279 = vmatpush.bf16.msra.mxu0 %v269
        %280 = vmatpush.bf16.msra.mxu0 %v255
        %281 = vmatpush.bf16.msra.mxu0 %v253
        %282 = vmatmul.bf16.gmra.mxu0 %v265
        %v283 = vpop.f32.mrf.mxu0
        %v284 = vadd.f32 %v236, %v283
        %v285 = vpop.f32.mrf.mxu0
        %286 = vdwg.mxu0
        %287 = vmatpush.bf16.msra.mxu0 0
        %288 = vmatpush.bf16.msra.mxu0 0
        %289 = vmatpush.bf16.msra.mxu0 0
        %290 = vmatpush.bf16.msra.mxu0 0
        %291 = vmatpush.bf16.msra.mxu0 0
        %292 = vmatpush.bf16.msra.mxu0 %v272
        %293 = vmatpush.bf16.msra.mxu0 %v256
        %294 = vmatpush.bf16.msra.mxu0 %v254
        %295 = vmatmul.bf16.gmra.mxu0 %v265
        %v296 = vpop.f32.mrf.mxu0
        %v297 = vadd.f32 %v236, %v296
        %v298 = vpop.f32.mrf.mxu0
        %299 = vdwg.mxu0
        %vm300 = vcmp.ge.f32.partialorder %v284, 0.0
        %vm301 = vcmp.ge.f32.partialorder %v297, 0.0
        %v302 = vmul.f32 %v284, 0.01
        %v303 = vmul.f32 %v297, 0.01
        %v304 = vsel %vm300, %v284, %v302
        %v305 = vsel %vm301, %v297, %v303
        %306 = vst [vmem:[%s223] sm:$0xff] %v304
        %307 = vst [vmem:[%s223 + $0x8] sm:$0xff] %v305
        %s308 = smul.u32 2, %s14
        %p309 = scmp.lt.s32.totalorder %s308, 3
        %s310 = scalar_select %p309, %s308, 3
        %s311 = smul.addr %s310, 8
        %s312 = scalar_lea.vmem %s3, %s311
        // Predicated region
        $region71: #{conv2x_forward.2} parent=65 // pred_check
          %p313 = pneg %p100
        $region72: #{conv2x_forward.2} parent=65 // pred_check_branch
          %315 = sbr.rel (%p313) target = $region74
        $region73: #{conv2x_forward.2} parent=65 // pred_region
          %s316 = smul.u32 2, %s14
        $region74: #{conv2x_forward.2} parent=65 // pred_fallthru
          _
      $region66: #{conv2x_forward.2} parent=5 // pred_fallthru
        _
      %p317 = scmp.le.s32.totalorder 2, %s9
      // Predicated region
      $region75: #{conv2x_forward.2} parent=5 // pred_check
        %p318 = pneg %p317
      $region76: #{conv2x_forward.2} parent=5 // pred_check_branch
        %320 = sbr.rel (%p318) target = $region78
      $region77: #{conv2x_forward.2} parent=5 // pred_region
        %s321 = ssub.s32 %s9, 2
        // Predicated region
        $region79: #{conv2x_forward.2} parent=77 // pred_check
          %p322 = pneg %p106
        $region80: #{conv2x_forward.2} parent=77 // pred_check_branch
          %324 = sbr.rel (%p322) target = $region82
        $region81: #{conv2x_forward.2} parent=77 // pred_region
          %s325 = smul.u32 2, %s15
          %p326 = scmp.lt.s32.totalorder %s325, 3
          %s327 = scalar_select %p326, %s325, 3
          %s328 = smul.addr %s327, 8
          %s329 = scalar_lea.vmem %s3, %s328
        $region82: #{conv2x_forward.2} parent=77 // pred_fallthru
          _
      $region78: #{conv2x_forward.2} parent=5 // pred_fallthru
        _
    $region6: #{conv2x_forward.2} parent=1 // loop_footer
      %s13 = sadd.s32 1, %s9
    $region7: #{conv2x_forward.2} parent=1 // loop_footer_branch
      %8 = sbr.rel target = $region3
    $region8: #{conv2x_forward.2} parent=1 // loop_exit
      _

// kernel: conv2x_forward.3
$region0: #{conv2x_forward.3}
  #allocation0 [shape = 'u32[]', space=smem, size = 0x4, offset = 0x4, fixed_abs, tag = 'smem constant byte address 0x4 - core index']
  #allocation1 [shape = 'u32[72,128]{1,0:T(1,128)}', space=vmem, size = 0x9000, scoped, tag = 'internal scratch']
  %s0 = inlined_call_operand.vmem [shape: bf16[16,144], index: 0, kind: input, shape index: {}]
  %s1 = inlined_call_operand.vmem [shape: bf16[144,512], index: 1, kind: input, shape index: {}]
  %s2 = inlined_call_operand.vmem [shape: f32[16,1], index: 2, kind: input, shape index: {}]
  %s3 = inlined_call_operand.vmem [shape: f32[16,512], index: 3, kind: output, shape index: {}]
  %s4 = sld [smem:[#allocation0]]
  $region102: #{conv2x_forward.3} parent=0
    _
  %s6 = ssub.s32 1, %s4
  %s7 = scalar_select 0, %s6, %s4
  $region1: #{conv2x_forward.3} parent=0
    #allocation2 [shape = 'u8[147456]{0}', space=vmem, size = 0x24000, scoped, tag = 'input window, operand 1']
    #allocation3 [shape = 'u8[32768]{0}', space=vmem, size = 0x8000, scoped, tag = 'output window, operand 0']
    loop: start=0, step=1, limit=4
    $region2: #{conv2x_forward.3} parent=1 // loop_pre_header
      _
    $region3: #{conv2x_forward.3} parent=1 // loop_header
      %s9 = sphi 0, %s13
      %p10 = scmp.ge.s32.totalorder %s9, 4
      %s17 = sphi 0, %s17
      %s19 = sphi 0, %s17
      %s20 = sphi 0, %s19
      %s34 = sphi 0, %s20
      %s40 = sphi 0, %s42
      %s43 = sphi 0, %s40
      %s44 = sphi 0, %s43
      %s60 = sphi 0, %s44
      %s64 = sphi 0, %s64
      %s66 = sphi 0, %s64
      %s67 = sphi 0, %s66
      %s81 = sphi 0, %s67
      %s87 = sphi 0, %s89
      %s90 = sphi 0, %s87
      %s91 = sphi 0, %s90
      %s107 = sphi 0, %s91
    $region4: #{conv2x_forward.3} parent=1 // loop_header_branch
      %12 = sbr.rel (%p10) target = $region8
    $region5: #{conv2x_forward.3} parent=1 // loop_body
      %s14 = ssub.s32 %s9, 1
      %s15 = ssub.s32 %s9, 2
      %s16 = sadd.s32 %s9, 1
      %s18 = sadd.s32 %s17, 1
      %p21 = scmp.eq.s32.totalorder %s9, 1
      %p22 = scmp.ne.s32.totalorder %s17, %s19
      %p23 = scmp.eq.s32.totalorder %s9, 0
      %p24 = por %p22, %p23
      %p25 = scmp.ne.s32.totalorder %s17, %s19
      %p26 = scmp.eq.s32.totalorder %s14, 1
      %p27 = por %p25, %p26
      %p28 = scmp.ne.s32.totalorder %s19, %s20
      %p29 = scmp.eq.s32.totalorder %s14, 0
      %p30 = por %p28, %p29
      %p31 = scmp.ne.s32.totalorder %s19, %s20
      %p32 = scmp.eq.s32.totalorder %s15, 1
      %p33 = por %p31, %p32
      %p35 = scmp.ne.s32.totalorder %s20, %s34
      %p36 = scmp.eq.s32.totalorder %s15, 0
      %p37 = por %p35, %p36
      %s38 = ssub.s32 %s9, %s16
      %p39 = scmp.eq.s32.totalorder %s38, 0
      %s41 = sadd.s32 %s40, 1
      %s42 = scalar_select %p39, %s40, %s41
      %p45 = pneg %p39
      %p46 = scmp.eq.s32.totalorder %s9, 1
      %p47 = por %p45, %p46
      %p48 = scmp.ne.s32.totalorder %s40, %s43
      %p49 = scmp.eq.s32.totalorder %s9, 0
      %p50 = por %p48, %p49
      %p51 = scmp.ne.s32.totalorder %s40, %s43
      %p52 = scmp.eq.s32.totalorder %s14, 1
      %p53 = por %p51, %p52
      %p54 = scmp.ne.s32.totalorder %s43, %s44
      %p55 = scmp.eq.s32.totalorder %s14, 0
      %p56 = por %p54, %p55
      %p57 = scmp.ne.s32.totalorder %s43, %s44
      %p58 = scmp.eq.s32.totalorder %s15, 1
      %p59 = por %p57, %p58
      %p61 = scmp.ne.s32.totalorder %s44, %s60
      %p62 = scmp.eq.s32.totalorder %s15, 0
      %p63 = por %p61, %p62
      %s65 = sadd.s32 %s64, 1
      %p68 = scmp.eq.s32.totalorder %s9, 1
      %p69 = scmp.ne.s32.totalorder %s64, %s66
      %p70 = scmp.eq.s32.totalorder %s9, 0
      %p71 = por %p69, %p70
      %p72 = scmp.ne.s32.totalorder %s64, %s66
      %p73 = scmp.eq.s32.totalorder %s14, 1
      %p74 = por %p72, %p73
      %p75 = scmp.ne.s32.totalorder %s66, %s67
      %p76 = scmp.eq.s32.totalorder %s14, 0
      %p77 = por %p75, %p76
      %p78 = scmp.ne.s32.totalorder %s66, %s67
      %p79 = scmp.eq.s32.totalorder %s15, 1
      %p80 = por %p78, %p79
      %p82 = scmp.ne.s32.totalorder %s67, %s81
      %p83 = scmp.eq.s32.totalorder %s15, 0
      %p84 = por %p82, %p83
      %s85 = ssub.s32 %s9, %s16
      %p86 = scmp.eq.s32.totalorder %s85, 0
      %s88 = sadd.s32 %s87, 1
      %s89 = scalar_select %p86, %s87, %s88
      %p92 = pneg %p86
      %p93 = scmp.eq.s32.totalorder %s9, 1
      %p94 = por %p92, %p93
      %p95 = scmp.ne.s32.totalorder %s87, %s90
      %p96 = scmp.eq.s32.totalorder %s9, 0
      %p97 = por %p95, %p96
      %p98 = scmp.ne.s32.totalorder %s87, %s90
      %p99 = scmp.eq.s32.totalorder %s14, 1
      %p100 = por %p98, %p99
      %p101 = scmp.ne.s32.totalorder %s90, %s91
      %p102 = scmp.eq.s32.totalorder %s14, 0
      %p103 = por %p101, %p102
      %p104 = scmp.ne.s32.totalorder %s90, %s91
      %p105 = scmp.eq.s32.totalorder %s15, 1
      %p106 = por %p104, %p105
      %p108 = scmp.ne.s32.totalorder %s91, %s107
      %p109 = scmp.eq.s32.totalorder %s15, 0
      %p110 = por %p108, %p109
      %p111 = scmp.le.s32.totalorder 1, %s9
      %p112 = scmp.lt.s32.totalorder %s9, 3
      %p113 = pnand %p111, %p112
      %p114 = pneg %p113
      // Predicated region
      $region9: #{conv2x_forward.3} parent=5 // pred_check
        _
      $region10: #{conv2x_forward.3} parent=5 // pred_check_branch
        %116 = sbr.rel (%p113) target = $region12
      $region11: #{conv2x_forward.3} parent=5 // pred_region
        %s117 = ssub.s32 %s9, 1
        // Predicated region
        $region13: #{conv2x_forward.3} parent=11 // pred_check
          %p118 = pneg %p30
        $region14: #{conv2x_forward.3} parent=11 // pred_check_branch
          %120 = sbr.rel (%p118) target = $region16
        $region15: #{conv2x_forward.3} parent=11 // pred_region
          _
        $region16: #{conv2x_forward.3} parent=11 // pred_fallthru
          _
        // Predicated region
        $region17: #{conv2x_forward.3} parent=11 // pred_check
          %p121 = pneg %p77
        $region18: #{conv2x_forward.3} parent=11 // pred_check_branch
          %123 = sbr.rel (%p121) target = $region20
        $region19: #{conv2x_forward.3} parent=11 // pred_region
          _
        $region20: #{conv2x_forward.3} parent=11 // pred_fallthru
          _
      $region12: #{conv2x_forward.3} parent=5 // pred_fallthru
        _
      %p124 = scmp.lt.s32.totalorder %s9, 2
      // Predicated region
      $region21: #{conv2x_forward.3} parent=5 // pred_check
        %p125 = pneg %p124
      $region22: #{conv2x_forward.3} parent=5 // pred_check_branch
        %127 = sbr.rel (%p125) target = $region24
      $region23: #{conv2x_forward.3} parent=5 // pred_region
        // Predicated region
        $region25: #{conv2x_forward.3} parent=23 // pred_check
          %p128 = pneg %p50
        $region26: #{conv2x_forward.3} parent=23 // pred_check_branch
          %130 = sbr.rel (%p128) target = $region28
        $region27: #{conv2x_forward.3} parent=23 // pred_region
          %s131 = sand.u32 %s40, 1
          %s132 = sand.u32 %s40, 1
          %s133 = smul.addr %s132, 144
          %s134 = scalar_lea.vmem [#allocation2], %s133
          %s135 = smul.u32 2, %s9
          %s136 = smul.addr %s135, 4
          %s137 = scalar_lea.vmem %s1, %s136
          // Predicated region
          $region29: #{conv2x_forward.3} parent=27 // pred_check
            _
          $region30: #{conv2x_forward.3} parent=27 // pred_check_branch
            %139 = sbr.rel (0) target = $region32
          $region31: #{conv2x_forward.3} parent=27 // pred_region
            // Predicated region
            $region33: #{conv2x_forward.3} parent=31 // pred_check
              _
            $region34: #{conv2x_forward.3} parent=31 // pred_check_branch
              %141 = sbr.rel (0) target = $region36
            $region35: #{conv2x_forward.3} parent=31 // pred_region
              // Predicated region
              $region48: #{conv2x_forward.3} parent=35 // pred_check
                _
              $region49: #{conv2x_forward.3} parent=35 // pred_check_branch
                %191 = sbr.rel (0) target = $region51
              $region50: #{conv2x_forward.3} parent=35 // pred_region
                loop: start=0, step=1, limit=1
                $region52: #{conv2x_forward.3} parent=50 // loop_pre_header
                  _
                $region53: #{conv2x_forward.3} parent=50 // loop_header
                  %s193 = sphi 0, %s197
                  %p194 = scmp.ge.s32.totalorder %s193, 1
                  %s198 = sphi %s137, %s137
                  %s199 = sphi %s134, %s134
                $region54: #{conv2x_forward.3} parent=50 // loop_header_branch
                  %196 = sbr.rel (%p194) target = $region58
                $region55: #{conv2x_forward.3} parent=50 // loop_body
                  %v200 = vld [vmem:[%s198] sm:$0xff]
                  %201 = vst [vmem:[%s199] sm:$0xff] %v200
                  %v202 = vld [vmem:[%s198 + $0x10] sm:$0xff]
                  %203 = vst [vmem:[%s199 + $0x8] sm:$0xff] %v202
                  %v204 = vld [vmem:[%s198 + $0x20] sm:$0xff]
                  %205 = vst [vmem:[%s199 + $0x10] sm:$0xff] %v204
                  %v206 = vld [vmem:[%s198 + $0x30] sm:$0xff]
                  %207 = vst [vmem:[%s199 + $0x18] sm:$0xff] %v206
                  %v208 = vld [vmem:[%s198 + $0x40] sm:$0xff]
                  %209 = vst [vmem:[%s199 + $0x20] sm:$0xff] %v208
                  %v210 = vld [vmem:[%s198 + $0x50] sm:$0xff]
                  %211 = vst [vmem:[%s199 + $0x28] sm:$0xff] %v210
                  %v212 = vld [vmem:[%s198 + $0x60] sm:$0xff]
                  %213 = vst [vmem:[%s199 + $0x30] sm:$0xff] %v212
                  %v214 = vld [vmem:[%s198 + $0x70] sm:$0xff]
                  %215 = vst [vmem:[%s199 + $0x38] sm:$0xff] %v214
                  %v216 = vld [vmem:[%s198 + $0x80] sm:$0xff]
                  %217 = vst [vmem:[%s199 + $0x40] sm:$0xff] %v216
                  %v218 = vld [vmem:[%s198 + $0x90] sm:$0xff]
                  %219 = vst [vmem:[%s199 + $0x48] sm:$0xff] %v218
                  %v220 = vld [vmem:[%s198 + $0xa0] sm:$0xff]
                  %221 = vst [vmem:[%s199 + $0x50] sm:$0xff] %v220
                  %v222 = vld [vmem:[%s198 + $0xb0] sm:$0xff]
                  %223 = vst [vmem:[%s199 + $0x58] sm:$0xff] %v222
                  %v224 = vld [vmem:[%s198 + $0xc0] sm:$0xff]
                  %225 = vst [vmem:[%s199 + $0x60] sm:$0xff] %v224
                  %v226 = vld [vmem:[%s198 + $0xd0] sm:$0xff]
                  %227 = vst [vmem:[%s199 + $0x68] sm:$0xff] %v226
                  %v228 = vld [vmem:[%s198 + $0xe0] sm:$0xff]
                  %229 = vst [vmem:[%s199 + $0x70] sm:$0xff] %v228
                  %v230 = vld [vmem:[%s198 + $0xf0] sm:$0xff]
                  %231 = vst [vmem:[%s199 + $0x78] sm:$0xff] %v230
                  %v232 = vld [vmem:[%s198 + $0x100] sm:$0xff]
                  %233 = vst [vmem:[%s199 + $0x80] sm:$0xff] %v232
                  %v234 = vld [vmem:[%s198 + $0x110] sm:$0xff]
                  %235 = vst [vmem:[%s199 + $0x88] sm:$0xff] %v234
                $region56: #{conv2x_forward.3} parent=50 // loop_footer
                  %s197 = sadd.s32 1, %s193
                $region57: #{conv2x_forward.3} parent=50 // loop_footer_branch
                  %192 = sbr.rel target = $region53
                $region58: #{conv2x_forward.3} parent=50 // loop_exit
                  _
              $region51: #{conv2x_forward.3} parent=35 // pred_fallthru
                _
              // Predicated region
              $region59: #{conv2x_forward.3} parent=35 // pred_check
                _
              $region60: #{conv2x_forward.3} parent=35 // pred_check_branch
                %237 = sbr.rel target = $region62
              $region61: #{conv2x_forward.3} parent=35 // pred_region
                _
              $region62: #{conv2x_forward.3} parent=35 // pred_fallthru
                _
            $region36: #{conv2x_forward.3} parent=31 // pred_fallthru
              _
            // Predicated region
            $region37: #{conv2x_forward.3} parent=31 // pred_check
              _
            $region38: #{conv2x_forward.3} parent=31 // pred_check_branch
              %143 = sbr.rel target = $region40
            $region39: #{conv2x_forward.3} parent=31 // pred_region
              %s145 = ssub.s32 256, 1
              loop: start=0, step=1, limit=1
              $region41: #{conv2x_forward.3} parent=39 // loop_pre_header
                _
              $region42: #{conv2x_forward.3} parent=39 // loop_header
                %s147 = sphi 0, %s151
                %p148 = scmp.ge.s32.totalorder %s147, 1
                %s152 = sphi %s137, %s137
                %s153 = sphi %s134, %s134
              $region43: #{conv2x_forward.3} parent=39 // loop_header_branch
                %150 = sbr.rel (%p148) target = $region47
              $region44: #{conv2x_forward.3} parent=39 // loop_body
                %v154 = vld [vmem:[%s152] sm:%s145]
                %155 = vst [vmem:[%s153] sm:%s145] %v154
                %v156 = vld [vmem:[%s152 + $0x10] sm:%s145]
                %157 = vst [vmem:[%s153 + $0x8] sm:%s145] %v156
                %v158 = vld [vmem:[%s152 + $0x20] sm:%s145]
                %159 = vst [vmem:[%s153 + $0x10] sm:%s145] %v158
                %v160 = vld [vmem:[%s152 + $0x30] sm:%s145]
                %161 = vst [vmem:[%s153 + $0x18] sm:%s145] %v160
                %v162 = vld [vmem:[%s152 + $0x40] sm:%s145]
                %163 = vst [vmem:[%s153 + $0x20] sm:%s145] %v162
                %v164 = vld [vmem:[%s152 + $0x50] sm:%s145]
                %165 = vst [vmem:[%s153 + $0x28] sm:%s145] %v164
                %v166 = vld [vmem:[%s152 + $0x60] sm:%s145]
                %167 = vst [vmem:[%s153 + $0x30] sm:%s145] %v166
                %v168 = vld [vmem:[%s152 + $0x70] sm:%s145]
                %169 = vst [vmem:[%s153 + $0x38] sm:%s145] %v168
                %v170 = vld [vmem:[%s152 + $0x80] sm:%s145]
                %171 = vst [vmem:[%s153 + $0x40] sm:%s145] %v170
                %v172 = vld [vmem:[%s152 + $0x90] sm:%s145]
                %173 = vst [vmem:[%s153 + $0x48] sm:%s145] %v172
                %v174 = vld [vmem:[%s152 + $0xa0] sm:%s145]
                %175 = vst [vmem:[%s153 + $0x50] sm:%s145] %v174
                %v176 = vld [vmem:[%s152 + $0xb0] sm:%s145]
                %177 = vst [vmem:[%s153 + $0x58] sm:%s145] %v176
                %v178 = vld [vmem:[%s152 + $0xc0] sm:%s145]
                %179 = vst [vmem:[%s153 + $0x60] sm:%s145] %v178
                %v180 = vld [vmem:[%s152 + $0xd0] sm:%s145]
                %181 = vst [vmem:[%s153 + $0x68] sm:%s145] %v180
                %v182 = vld [vmem:[%s152 + $0xe0] sm:%s145]
                %183 = vst [vmem:[%s153 + $0x70] sm:%s145] %v182
                %v184 = vld [vmem:[%s152 + $0xf0] sm:%s145]
                %185 = vst [vmem:[%s153 + $0x78] sm:%s145] %v184
                %v186 = vld [vmem:[%s152 + $0x100] sm:%s145]
                %187 = vst [vmem:[%s153 + $0x80] sm:%s145] %v186
                %v188 = vld [vmem:[%s152 + $0x110] sm:%s145]
                %189 = vst [vmem:[%s153 + $0x88] sm:%s145] %v188
              $region45: #{conv2x_forward.3} parent=39 // loop_footer
                %s151 = sadd.s32 1, %s147
              $region46: #{conv2x_forward.3} parent=39 // loop_footer_branch
                %146 = sbr.rel target = $region42
              $region47: #{conv2x_forward.3} parent=39 // loop_exit
                _
            $region40: #{conv2x_forward.3} parent=31 // pred_fallthru
              _
          $region32: #{conv2x_forward.3} parent=27 // pred_fallthru
            _
          %238 = vnop
        $region28: #{conv2x_forward.3} parent=23 // pred_fallthru
          _
      $region24: #{conv2x_forward.3} parent=5 // pred_fallthru
        _
      %p239 = scmp.le.s32.totalorder 1, %s9
      %p240 = scmp.lt.s32.totalorder %s9, 3
      %p241 = pnand %p239, %p240
      %p242 = pneg %p241
      // Predicated region
      $region63: #{conv2x_forward.3} parent=5 // pred_check
        _
      $region64: #{conv2x_forward.3} parent=5 // pred_check_branch
        %244 = sbr.rel (%p241) target = $region66
      $region65: #{conv2x_forward.3} parent=5 // pred_region
        %s245 = ssub.s32 %s9, 1
        %s246 = sand.u32 %s43, 1
        %s247 = sand.u32 %s43, 1
        %s248 = smul.addr %s247, 144
        %s249 = scalar_lea.vmem [#allocation2], %s248
        // Predicated region
        $region67: #{conv2x_forward.3} parent=65 // pred_check
          %p250 = pneg %p56
        $region68: #{conv2x_forward.3} parent=65 // pred_check_branch
          %252 = sbr.rel (%p250) target = $region70
        $region69: #{conv2x_forward.3} parent=65 // pred_region
          _
        $region70: #{conv2x_forward.3} parent=65 // pred_fallthru
          _
        %p253 = pneg %p30
        %p254 = pneg %p27
        %s255 = sand.u32 %s43, 1
        %s256 = sand.u32 %s43, 1
        %s257 = smul.addr %s256, 144
        %s258 = scalar_lea.vmem [#allocation2], %s257
        %p259 = pneg %p56
        %p260 = pneg %p53
        %p261 = pneg %p77
        %p262 = pneg %p74
        %p263 = pneg %p103
        %p264 = pneg %p100
        %s265 = sand.u32 %s90, 1
        %s266 = sand.u32 %s90, 1
        %s267 = smul.addr %s266, 32
        %s268 = scalar_lea.vmem [#allocation3], %s267
        %s269 = smul.u32 2, %s14
        %s270 = smul.u32 2, %s14
        %v272 = vld [vmem:[%s0] sm:$0xff]
        %v273 = vld [vmem:[%s0 + $0x8] sm:$0xff]
        %v274 = vld [vmem:[%s249] sm:$0xff]
        %v275 = vld [vmem:[%s249 + $0x8] sm:$0xff]
        %v276 = vld [vmem:[%s249 + $0x10] sm:$0xff]
        %v277 = vld [vmem:[%s249 + $0x18] sm:$0xff]
        %v278 = vld [vmem:[%s249 + $0x20] sm:$0xff]
        %v279 = vld [vmem:[%s249 + $0x28] sm:$0xff]
        %v280 = vld [vmem:[%s249 + $0x30] sm:$0xff]
        %v281 = vld [vmem:[%s249 + $0x38] sm:$0xff]
        %v282 = vld [vmem:[%s249 + $0x40] sm:$0xff]
        %v283 = vld [vmem:[%s249 + $0x48] sm:$0xff]
        %v284 = vld [vmem:[%s249 + $0x50] sm:$0xff]
        %v285 = vld [vmem:[%s249 + $0x58] sm:$0xff]
        %v286 = vld [vmem:[%s249 + $0x60] sm:$0xff]
        %v287 = vld [vmem:[%s249 + $0x68] sm:$0xff]
        %v288 = vld [vmem:[%s249 + $0x70] sm:$0xff]
        %v289 = vld [vmem:[%s249 + $0x78] sm:$0xff]
        %v290 = vld [vmem:[%s249 + $0x80] sm:$0xff]
        %v291 = vld [vmem:[%s249 + $0x88] sm:$0xff]
        %v292 = vld [vmem:[%s2] sm:$0xff]
        %v293 = vld [vmem:[%s2 + $0x8] sm:$0xff]
        %295 = vset.pattern.permute.xlu0 0
        %296 = vperm.xlu0 %295, %v292
        %v297 = vpop.permute.xlu0 %296
        %300 = vset.pattern.permute.xlu0 0
        %301 = vperm.xlu0 %300, %v293
        %v302 = vpop.permute.xlu0 %301
        %v306 = vunpack.c.l.b16 %v272
        %v307 = vunpack.c.h.b16 %v272
        %v308 = vunpack.c.l.b16 %v273
        %v309 = vunpack.c.h.b16 %v273
        %v310 = vpack.c.b16 %v308, %v306
        %v311 = vpack.c.b16 %v309, %v307
        %v331 = vunpack.c.l.b16 %v274
        %v332 = vunpack.c.h.b16 %v274
        %v333 = vunpack.c.l.b16 %v275
        %v334 = vunpack.c.h.b16 %v275
        %v335 = vunpack.c.l.b16 %v276
        %v336 = vunpack.c.h.b16 %v276
        %v337 = vunpack.c.l.b16 %v277
        %v338 = vunpack.c.h.b16 %v277
        %v339 = vunpack.c.l.b16 %v278
        %v340 = vunpack.c.h.b16 %v278
        %v341 = vunpack.c.l.b16 %v279
        %v342 = vunpack.c.h.b16 %v279
        %v343 = vunpack.c.l.b16 %v280
        %v344 = vunpack.c.h.b16 %v280
        %v345 = vunpack.c.l.b16 %v281
        %v346 = vunpack.c.h.b16 %v281
        %v347 = vunpack.c.l.b16 %v282
        %v348 = vunpack.c.h.b16 %v282
        %v349 = vunpack.c.l.b16 %v283
        %v350 = vunpack.c.h.b16 %v283
        %v351 = vunpack.c.l.b16 %v284
        %v352 = vunpack.c.h.b16 %v284
        %v353 = vunpack.c.l.b16 %v285
        %v354 = vunpack.c.h.b16 %v285
        %v355 = vunpack.c.l.b16 %v286
        %v356 = vunpack.c.h.b16 %v286
        %v357 = vunpack.c.l.b16 %v287
        %v358 = vunpack.c.h.b16 %v287
        %v359 = vunpack.c.l.b16 %v288
        %v360 = vunpack.c.h.b16 %v288
        %v361 = vunpack.c.l.b16 %v289
        %v362 = vunpack.c.h.b16 %v289
        %v363 = vunpack.c.l.b16 %v290
        %v364 = vunpack.c.h.b16 %v290
        %v365 = vunpack.c.l.b16 %v291
        %v366 = vunpack.c.h.b16 %v291
        %v367 = vpack.c.b16 %v333, %v331
        %v368 = vpack.c.b16 %v334, %v332
        %v369 = vpack.c.b16 %v337, %v335
        %v370 = vpack.c.b16 %v338, %v336
        %v371 = vpack.c.b16 %v341, %v339
        %v372 = vpack.c.b16 %v342, %v340
        %v373 = vpack.c.b16 %v345, %v343
        %v374 = vpack.c.b16 %v346, %v344
        %v375 = vpack.c.b16 %v349, %v347
        %v376 = vpack.c.b16 %v350, %v348
        %v377 = vpack.c.b16 %v353, %v351
        %v378 = vpack.c.b16 %v354, %v352
        %v379 = vpack.c.b16 %v357, %v355
        %v380 = vpack.c.b16 %v358, %v356
        %v381 = vpack.c.b16 %v361, %v359
        %v382 = vpack.c.b16 %v362, %v360
        %v383 = vpack.c.b16 %v365, %v363
        %v384 = vpack.c.b16 %v366, %v364
        %vm403 = vcmask 130048
        %v405 = vsel %vm403, %v311, 0
        %407 = vmatpush.bf16.msra.mxu0 %v381
        %408 = vmatpush.bf16.msra.mxu0 %v379
        %409 = vmatpush.bf16.msra.mxu0 %v377
        %410 = vmatpush.bf16.msra.mxu0 %v375
        %411 = vmatpush.bf16.msra.mxu0 %v373
        %412 = vmatpush.bf16.msra.mxu0 %v371
        %413 = vmatpush.bf16.msra.mxu0 %v369
        %414 = vmatpush.bf16.msra.mxu0 %v367
        %415 = vmatmul.bf16.gmra.mxu0 %v310
        %v416 = vpop.f32.mrf.mxu0
        %v417 = vadd.f32 %v297, %v416
        %v418 = vpop.f32.mrf.mxu0
        %v419 = vadd.f32 %v302, %v418
        %420 = vdwg.mxu0
        %421 = vmatpush.bf16.msra.mxu0 0
        %422 = vmatpush.bf16.msra.mxu0 0
        %423 = vmatpush.bf16.msra.mxu0 0
        %424 = vmatpush.bf16.msra.mxu0 0
        %425 = vmatpush.bf16.msra.mxu0 0
        %426 = vmatpush.bf16.msra.mxu0 0
        %427 = vmatpush.bf16.msra.mxu0 0
        %428 = vmatpush.bf16.msra.mxu0 %v383
        %429 = vmatmul.bf16.gmra.mxu0 %v405
        %v430 = vpop.f32.mrf.mxu0
        %v431 = vadd.f32 %v417, %v430
        %v432 = vpop.f32.mrf.mxu0
        %v433 = vadd.f32 %v419, %v432
        %434 = vdwg.mxu0
        %435 = vmatpush.bf16.msra.mxu0 %v382
        %436 = vmatpush.bf16.msra.mxu0 %v380
        %437 = vmatpush.bf16.msra.mxu0 %v378
        %438 = vmatpush.bf16.msra.mxu0 %v376
        %439 = vmatpush.bf16.msra.mxu0 %v374
        %440 = vmatpush.bf16.msra.mxu0 %v372
        %441 = vmatpush.bf16.msra.mxu0 %v370
        %442 = vmatpush.bf16.msra.mxu0 %v368
        %443 = vmatmul.bf16.gmra.mxu0 %v310
        %v444 = vpop.f32.mrf.mxu0
        %v445 = vadd.f32 %v297, %v444
        %v446 = vpop.f32.mrf.mxu0
        %v447 = vadd.f32 %v302, %v446
        %448 = vdwg.mxu0
        %449 = vmatpush.bf16.msra.mxu0 0
        %450 = vmatpush.bf16.msra.mxu0 0
        %451 = vmatpush.bf16.msra.mxu0 0
        %452 = vmatpush.bf16.msra.mxu0 0
        %453 = vmatpush.bf16.msra.mxu0 0
        %454 = vmatpush.bf16.msra.mxu0 0
        %455 = vmatpush.bf16.msra.mxu0 0
        %456 = vmatpush.bf16.msra.mxu0 %v384
        %457 = vmatmul.bf16.gmra.mxu0 %v405
        %v458 = vpop.f32.mrf.mxu0
        %v459 = vadd.f32 %v445, %v458
        %v460 = vpop.f32.mrf.mxu0
        %v461 = vadd.f32 %v447, %v460
        %462 = vdwg.mxu0
        %vm463 = vcmp.ge.f32.partialorder %v431, 0.0
        %vm464 = vcmp.ge.f32.partialorder %v459, 0.0
        %vm465 = vcmp.ge.f32.partialorder %v433, 0.0
        %vm466 = vcmp.ge.f32.partialorder %v461, 0.0
        %v467 = vmul.f32 %v431, 0.01
        %v468 = vmul.f32 %v459, 0.01
        %v469 = vmul.f32 %v433, 0.01
        %v470 = vmul.f32 %v461, 0.01
        %v471 = vsel %vm463, %v431, %v467
        %v472 = vsel %vm464, %v459, %v468
        %v473 = vsel %vm465, %v433, %v469
        %v474 = vsel %vm466, %v461, %v470
        %475 = vst [vmem:[%s268] sm:$0xff] %v471
        %476 = vst [vmem:[%s268 + $0x8] sm:$0xff] %v472
        %477 = vst [vmem:[%s268 + $0x10] sm:$0xff] %v473
        %478 = vst [vmem:[%s268 + $0x18] sm:$0xff] %v474
        %s479 = sand.u32 %s90, 1
        %s480 = sand.u32 %s90, 1
        %s481 = smul.addr %s480, 32
        %s482 = scalar_lea.vmem [#allocation3], %s481
        // Predicated region
        $region71: #{conv2x_forward.3} parent=65 // pred_check
          %p483 = pneg %p100
        $region72: #{conv2x_forward.3} parent=65 // pred_check_branch
          %485 = sbr.rel (%p483) target = $region74
        $region73: #{conv2x_forward.3} parent=65 // pred_region
          %s486 = smul.u32 2, %s14
          %s487 = smul.addr %s486, 8
          %s488 = scalar_lea.vmem %s3, %s487
          // Predicated region
          $region75: #{conv2x_forward.3} parent=73 // pred_check
            _
          $region76: #{conv2x_forward.3} parent=73 // pred_check_branch
            %490 = sbr.rel (0) target = $region78
          $region77: #{conv2x_forward.3} parent=73 // pred_region
            // Predicated region
            $region79: #{conv2x_forward.3} parent=77 // pred_check
              _
            $region80: #{conv2x_forward.3} parent=77 // pred_check_branch
              %492 = sbr.rel (0) target = $region82
            $region81: #{conv2x_forward.3} parent=77 // pred_region
              loop: start=0, step=1, limit=1
              $region83: #{conv2x_forward.3} parent=81 // loop_pre_header
                _
              $region84: #{conv2x_forward.3} parent=81 // loop_header
                %s494 = sphi 0, %s498
                %p495 = scmp.ge.s32.totalorder %s494, 1
                %s499 = sphi %s482, %s482
                %s500 = sphi %s488, %s488
              $region85: #{conv2x_forward.3} parent=81 // loop_header_branch
                %497 = sbr.rel (%p495) target = $region89
              $region86: #{conv2x_forward.3} parent=81 // loop_body
                %v501 = vld [vmem:[%s499] sm:$0xff]
                %502 = vst [vmem:[%s500] sm:$0xff] %v501
                %v503 = vld [vmem:[%s499 + $0x8] sm:$0xff]
                %504 = vst [vmem:[%s500 + $0x8] sm:$0xff] %v503
                %v505 = vld [vmem:[%s499 + $0x10] sm:$0xff]
                %506 = vst [vmem:[%s500 + $0x20] sm:$0xff] %v505
                %v507 = vld [vmem:[%s499 + $0x18] sm:$0xff]
                %508 = vst [vmem:[%s500 + $0x28] sm:$0xff] %v507
              $region87: #{conv2x_forward.3} parent=81 // loop_footer
                %s498 = sadd.s32 1, %s494
              $region88: #{conv2x_forward.3} parent=81 // loop_footer_branch
                %493 = sbr.rel target = $region84
              $region89: #{conv2x_forward.3} parent=81 // loop_exit
                _
            $region82: #{conv2x_forward.3} parent=77 // pred_fallthru
              _
            // Predicated region
            $region90: #{conv2x_forward.3} parent=77 // pred_check
              _
            $region91: #{conv2x_forward.3} parent=77 // pred_check_branch
              %510 = sbr.rel target = $region93
            $region92: #{conv2x_forward.3} parent=77 // pred_region
              _
            $region93: #{conv2x_forward.3} parent=77 // pred_fallthru
              _
          $region78: #{conv2x_forward.3} parent=73 // pred_fallthru
            _
          %511 = vnop
        $region74: #{conv2x_forward.3} parent=65 // pred_fallthru
          _
      $region66: #{conv2x_forward.3} parent=5 // pred_fallthru
        _
      %p512 = scmp.le.s32.totalorder 2, %s9
      // Predicated region
      $region94: #{conv2x_forward.3} parent=5 // pred_check
        %p513 = pneg %p512
      $region95: #{conv2x_forward.3} parent=5 // pred_check_branch
        %515 = sbr.rel (%p513) target = $region97
      $region96: #{conv2x_forward.3} parent=5 // pred_region
        %s516 = ssub.s32 %s9, 2
        // Predicated region
        $region98: #{conv2x_forward.3} parent=96 // pred_check
          %p517 = pneg %p106
        $region99: #{conv2x_forward.3} parent=96 // pred_check_branch
          %519 = sbr.rel (%p517) target = $region101
        $region100: #{conv2x_forward.3} parent=96 // pred_region
          %s520 = sand.u32 %s91, 1
          %s521 = sand.u32 %s91, 1
          %s522 = smul.addr %s521, 32
          %s523 = scalar_lea.vmem [#allocation3], %s522
        $region101: #{conv2x_forward.3} parent=96 // pred_fallthru
          _
      $region97: #{conv2x_forward.3} parent=5 // pred_fallthru
        _
    $region6: #{conv2x_forward.3} parent=1 // loop_footer
      %s13 = sadd.s32 1, %s9
    $region7: #{conv2x_forward.3} parent=1 // loop_footer_branch
      %8 = sbr.rel target = $region3
    $region8: #{conv2x_forward.3} parent=1 // loop_exit
      _

</llo_original>
